<compile_context>
chip_gen: v7x
topology: tpu7x:2x2x1
jax: 0.10.0
libtpu: 0.0.40
codegen_flags: <defaults>
</compile_context>

<pallas_src>
import functools

import jax
import jax.numpy as jnp
from jax.experimental import pallas as pl
from jax.experimental.pallas import tpu as pltpu

LANES = 128
MAX_INKERNEL_F = 32          # unrolled VPU gather stays ~HBM-bound up to here
MAX_TILE_R_GATHER = 1024     # small-F path: ~4 MiB block traffic per grid step
MAX_TILE_R_PLANES = 512      # fallback path also streams 9 color planes
_TILE_CANDIDATES = (1024, 512, 256, 128, 64, 32, 16, 8)


def _round_up(x, m):
    return ((x + m - 1) // m) * m


def _pick_tile_r(rows, max_tile):
    """Largest tile with <=12.5% padding waste and >=2 grid steps (v7x megacore)."""
    for cand in _TILE_CANDIDATES:
        if cand > max_tile or cand > rows:
            continue
        steps = -(-rows // cand)
        waste_ok = (steps * cand - rows) * 8 <= rows
        if waste_ok and steps >= 2:
            return cand
    for cand in _TILE_CANDIDATES:          # tiny inputs: single tile is fine
        if cand <= min(rows, max_tile):
            return cand
    return 8


def _shader_gather_kernel(bg_ref, tbl_ref, bary_ref, p2f_ref, out_ref, *, faces):
    """In-kernel color gather + barycentric interpolation + hard RGB blend.

    bg_ref:   (3,)              f32 SMEM   background color
    tbl_ref:  (faces*9,)        f32 SMEM   faces_verts_colors.reshape(F*9)
    bary_ref: (3, TILE_R, 128)  f32 VMEM   bary coords of the top (K=0) face
    p2f_ref:  (TILE_R, 128)     i32 VMEM   top-face id per pixel (-1 => bg)
    out_ref:  (4, TILE_R, 128)  f32 VMEM   r, g, b, alpha planes
    """
    p2f = p2f_ref[...]
    is_bg = p2f < 0
    b0 = bary_ref[0]
    b1 = bary_ref[1]
    b2 = bary_ref[2]

    # Gather the 9 per-face vertex-color planes (idx = v*3 + c) with a fully
    # unrolled compare/select sweep over faces.  Face masks are disjoint;
    # background pixels match no face and stay 0 (fixed by the blend select).
    # TODO(synk): for moderate F (hundreds) a one_hot @ table matmul on the
    # otherwise-idle MXU would scale better than this VPU sweep.
    cols = [jnp.zeros_like(b0) for _ in range(9)]
    for f in range(faces):
        m = p2f == f
        for idx in range(9):
            cols[idx] = jnp.where(m, tbl_ref[f * 9 + idx], cols[idx])

    for c in range(3):
        texel = cols[c] * b0 + cols[3 + c] * b1 + cols[6 + c] * b2
        out_ref[c] = jnp.where(is_bg, bg_ref[c], texel)
    out_ref[3] = jnp.where(is_bg, jnp.float32(0.0), jnp.float32(1.0))


def _shader_planes_kernel(bg_ref, colors_ref, bary_ref, p2f_ref, out_ref):
    """Fallback (large F): colors pre-gathered in XLA, interp + blend here.

    colors_ref: (9, TILE_R, 128) f32 VMEM  gathered face vertex colors, idx=v*3+c
    """
    is_bg = p2f_ref[...] < 0
    b0 = bary_ref[0]
    b1 = bary_ref[1]
    b2 = bary_ref[2]
    for c in range(3):
        texel = (colors_ref[c] * b0
                 + colors_ref[3 + c] * b1
                 + colors_ref[6 + c] * b2)
        out_ref[c] = jnp.where(is_bg, bg_ref[c], texel)
    out_ref[3] = jnp.where(is_bg, jnp.float32(0.0), jnp.float32(1.0))


@jax.jit
def simple_shader(pix_to_face, bary_coords, faces_verts_colors,
                  background_color):
    """Pallas implementation of SimpleShader.forward.

    pix_to_face:        (N, H, W, K) int32   (fragments.pix_to_face)
    bary_coords:        (N, H, W, K, 3) f32  (fragments.bary_coords)
    faces_verts_colors: (F, 3, 3) f32        (per-face per-vertex RGB "texture")
    background_color:   (3,) f32             (BlendParams.background_color)
    returns:            (N, H, W, 4) f32
    """
    N, H, W, K = pix_to_face.shape
    F = faces_verts_colors.shape[0]
    P = N * H * W

    p2f_top = pix_to_face[..., 0].reshape(P).astype(jnp.int32)             # (P,)
    bary = jnp.transpose(                                                  # (3, P)
        bary_coords[..., 0, :].reshape(P, 3).astype(jnp.float32), (1, 0))

    in_kernel_gather = F <= MAX_INKERNEL_F

    # Repack the flat pixel axis as (R, 128) so every kernel block is
    # (8,128)-dense; pick the tile divisor-aware (padding waste <=12.5%,
    # keep >=2 grid steps when possible so v7x's two TCs both get work).
    R = _round_up(max(-(-P // LANES), 8), 8)
    max_tile = MAX_TILE_R_GATHER if in_kernel_gather else MAX_TILE_R_PLANES
    tile_r = _pick_tile_r(R, max_tile)
    R = _round_up(R, tile_r)
    P_pad = R * LANES
    pad = P_pad - P

    if pad:
        bary = jnp.pad(bary, ((0, 0), (0, pad)))
        p2f = jnp.pad(p2f_top, (0, pad), constant_values=-1)   # pad -> background
    else:
        p2f = p2f_top
    bary = bary.reshape(3, R, LANES)
    p2f = p2f.reshape(R, LANES)
    bg = background_color.astype(jnp.float32).reshape(3)

    grid = (R // tile_r,)
    bary_spec = pl.BlockSpec((3, tile_r, LANES), lambda i: (0, i, 0))
    p2f_spec = pl.BlockSpec((tile_r, LANES), lambda i: (i, 0))
    out_spec = pl.BlockSpec((4, tile_r, LANES), lambda i: (0, i, 0))
    cparams = pltpu.CompilerParams(
        dimension_semantics=("parallel",),
        vmem_limit_bytes=32 * 1024 * 1024)

    if in_kernel_gather:
        # Tiny (F*9,) table rides in SMEM; no (9, P) colors array ever hits HBM.
        tbl = faces_verts_colors.astype(jnp.float32).reshape(F * 9)
        out = pl.pallas_call(
            functools.partial(_shader_gather_kernel, faces=F),
            out_shape=jax.ShapeDtypeStruct((4, R, LANES), jnp.float32),
            grid=grid,
            in_specs=[
                pl.BlockSpec(memory_space=pltpu.MemorySpace.SMEM),   # bg (3,)
                pl.BlockSpec(memory_space=pltpu.MemorySpace.SMEM),   # table (F*9,)
                bary_spec,
                p2f_spec,
            ],
            out_specs=out_spec,
            compiler_params=cparams,
            cost_estimate=pl.CostEstimate(
                flops=(10 * F + 24) * P_pad, transcendentals=0,
                bytes_accessed=32 * P_pad),
        )(bg, tbl, bary, p2f)
    else:
        # Large F: gather in XLA from a pre-transposed (9, F) table so the
        # result is already planar (9, P); kernel just interpolates + blends.
        table = jnp.transpose(faces_verts_colors.astype(jnp.float32),
                              (1, 2, 0)).reshape(9, F)
        idx = jnp.clip(p2f_top, 0, F - 1)
        colors = jnp.take(table, idx, axis=1)                        # (9, P)
        if pad:
            colors = jnp.pad(colors, ((0, 0), (0, pad)))
        colors = colors.reshape(9, R, LANES)
        out = pl.pallas_call(
            _shader_planes_kernel,
            out_shape=jax.ShapeDtypeStruct((4, R, LANES), jnp.float32),
            grid=grid,
            in_specs=[
                pl.BlockSpec(memory_space=pltpu.MemorySpace.SMEM),   # bg (3,)
                pl.BlockSpec((9, tile_r, LANES), lambda i: (0, i, 0)),
                bary_spec,
                p2f_spec,
            ],
            out_specs=out_spec,
            compiler_params=cparams,
            cost_estimate=pl.CostEstimate(
                flops=20 * P_pad, transcendentals=0,
                bytes_accessed=68 * P_pad),
        )(bg, colors, bary, p2f)

    # TODO(synk): a consumer that accepts planar (4, N, H, W) output could skip
    # this final (4,P)->(P,4) interleave pass on a bandwidth-bound pipeline.
    images = jnp.transpose(out.reshape(4, P_pad)[:, :P], (1, 0)).reshape(N, H, W, 4)
    return images


def reference(pix_to_face, bary_coords, faces_verts_colors, background_color):
    """Pure-JAX reference of sample_textures (TexturesVertex) + hard_rgb_blend."""
    F = faces_verts_colors.shape[0]
    p2f0 = pix_to_face[..., 0]                            # (N,H,W)
    b0 = bary_coords[..., 0, :]                           # (N,H,W,3)
    idx = jnp.clip(p2f0, 0, F - 1)
    gath = faces_verts_colors[idx]                        # (N,H,W,3,3)
    texel = (gath * b0[..., :, None]).sum(axis=-2)        # (N,H,W,3)
    is_bg = (p2f0 < 0)[..., None]                         # (N,H,W,1)
    rgb = jnp.where(is_bg, background_color, texel)
    alpha = (~is_bg).astype(jnp.float32)
    return jnp.concatenate([rgb, alpha], axis=-1)


if __name__ == "__main__":
    key = jax.random.PRNGKey(0)
    k1, k2, k3 = jax.random.split(key, 3)

    # Small, deterministic synthetic "fragments" and "meshes" textures.
    N, H, W, K, F = 2, 16, 16, 1, 8

    # fragments.pix_to_face: -1 marks background pixels.
    pix_to_face = jax.random.randint(k1, (N, H, W, K), -1, F, dtype=jnp.int32)

    # fragments.bary_coords: positive, normalized over the last axis.
    bary_raw = jax.random.uniform(k2, (N, H, W, K, 3), minval=0.1, maxval=1.0)
    bary_coords = bary_raw / bary_raw.sum(axis=-1, keepdims=True)

    # meshes textures (TexturesVertex): per-face per-vertex RGB.
    faces_verts_colors = jax.random.uniform(k3, (F, 3, 3), dtype=jnp.float32)

    # BlendParams default background_color = (1.0, 1.0, 1.0).
    background_color = jnp.array([1.0, 1.0, 1.0], dtype=jnp.float32)

    images = simple_shader(pix_to_face, bary_coords, faces_verts_colors,
                           background_color)
    images = jax.block_until_ready(images)

    expected = reference(pix_to_face, bary_coords, faces_verts_colors,
                         background_color)
    assert images.shape == (N, H, W, 4)
    assert jnp.allclose(images, expected, atol=1e-5, rtol=1e-5)

    print("KERNEL_OK")
</pallas_src>

<mosaic_0001>
module attributes {stable_mosaic.version = 11 : i64} {
  func.func @_shader_gather_kernel(%arg0: i32, %arg1: memref<3xf32, #tpu.memory_space<smem>>, %arg2: memref<72xf32, #tpu.memory_space<smem>>, %arg3: memref<3x8x128xf32, #tpu.memory_space<vmem>>, %arg4: memref<8x128xi32, #tpu.memory_space<vmem>>, %arg5: memref<4x8x128xf32, #tpu.memory_space<vmem>>) attributes {dimension_semantics = [#tpu.dimension_semantics<parallel>], iteration_bounds = array<i64: 1>, scalar_prefetch = 0 : i64, scratch_operands = 0 : i64, tpu.core_type = #tpu.core_type<tc>, window_params = [{transform_indices = @transform_0, window_bounds = array<i64: 3>}, {transform_indices = @transform_1, window_bounds = array<i64: 72>}, {transform_indices = @transform_2, window_bounds = array<i64: 3, 8, 128>}, {transform_indices = @transform_3, window_bounds = array<i64: 8, 128>}, {transform_indices = @transform_4, window_bounds = array<i64: 4, 8, 128>}]} {
    %c0 = arith.constant 0 : index
    %c0_0 = arith.constant 0 : index
    %0 = vector.load %arg4[%c0, %c0_0] : memref<8x128xi32, #tpu.memory_space<vmem>>, vector<8x128xi32>
    %c0_i32 = arith.constant 0 : i32
    %1 = vector.broadcast %c0_i32 : i32 to vector<8x128xi32>
    %2 = arith.cmpi slt, %0, %1 : vector<8x128xi32>
    %c0_1 = arith.constant 0 : index
    %c0_2 = arith.constant 0 : index
    %c0_3 = arith.constant 0 : index
    %3 = vector.load %arg3[%c0_1, %c0_2, %c0_3] : memref<3x8x128xf32, #tpu.memory_space<vmem>>, vector<1x8x128xf32>
    %4 = vector.shape_cast %3 : vector<1x8x128xf32> to vector<8x128xf32>
    %c1 = arith.constant 1 : index
    %c0_4 = arith.constant 0 : index
    %c0_5 = arith.constant 0 : index
    %5 = vector.load %arg3[%c1, %c0_4, %c0_5] : memref<3x8x128xf32, #tpu.memory_space<vmem>>, vector<1x8x128xf32>
    %6 = vector.shape_cast %5 : vector<1x8x128xf32> to vector<8x128xf32>
    %c2 = arith.constant 2 : index
    %c0_6 = arith.constant 0 : index
    %c0_7 = arith.constant 0 : index
    %7 = vector.load %arg3[%c2, %c0_6, %c0_7] : memref<3x8x128xf32, #tpu.memory_space<vmem>>, vector<1x8x128xf32>
    %8 = vector.shape_cast %7 : vector<1x8x128xf32> to vector<8x128xf32>
    %cst = arith.constant 0.000000e+00 : f32
    %9 = vector.broadcast %cst : f32 to vector<8x128xf32>
    %cst_8 = arith.constant 0.000000e+00 : f32
    %10 = vector.broadcast %cst_8 : f32 to vector<8x128xf32>
    %cst_9 = arith.constant 0.000000e+00 : f32
    %11 = vector.broadcast %cst_9 : f32 to vector<8x128xf32>
    %cst_10 = arith.constant 0.000000e+00 : f32
    %12 = vector.broadcast %cst_10 : f32 to vector<8x128xf32>
    %cst_11 = arith.constant 0.000000e+00 : f32
    %13 = vector.broadcast %cst_11 : f32 to vector<8x128xf32>
    %cst_12 = arith.constant 0.000000e+00 : f32
    %14 = vector.broadcast %cst_12 : f32 to vector<8x128xf32>
    %cst_13 = arith.constant 0.000000e+00 : f32
    %15 = vector.broadcast %cst_13 : f32 to vector<8x128xf32>
    %cst_14 = arith.constant 0.000000e+00 : f32
    %16 = vector.broadcast %cst_14 : f32 to vector<8x128xf32>
    %cst_15 = arith.constant 0.000000e+00 : f32
    %17 = vector.broadcast %cst_15 : f32 to vector<8x128xf32>
    %c0_i32_16 = arith.constant 0 : i32
    %18 = vector.broadcast %c0_i32_16 : i32 to vector<8x128xi32>
    %19 = arith.cmpi eq, %0, %18 : vector<8x128xi32>
    %c0_17 = arith.constant 0 : index
    %20 = memref.load %arg2[%c0_17] : memref<72xf32, #tpu.memory_space<smem>>
    %21 = vector.broadcast %20 : f32 to vector<8x128xf32>
    %22 = arith.select %19, %21, %9 : vector<8x128xi1>, vector<8x128xf32>
    %c1_18 = arith.constant 1 : index
    %23 = memref.load %arg2[%c1_18] : memref<72xf32, #tpu.memory_space<smem>>
    %24 = vector.broadcast %23 : f32 to vector<8x128xf32>
    %25 = arith.select %19, %24, %10 : vector<8x128xi1>, vector<8x128xf32>
    %c2_19 = arith.constant 2 : index
    %26 = memref.load %arg2[%c2_19] : memref<72xf32, #tpu.memory_space<smem>>
    %27 = vector.broadcast %26 : f32 to vector<8x128xf32>
    %28 = arith.select %19, %27, %11 : vector<8x128xi1>, vector<8x128xf32>
    %c3 = arith.constant 3 : index
    %29 = memref.load %arg2[%c3] : memref<72xf32, #tpu.memory_space<smem>>
    %30 = vector.broadcast %29 : f32 to vector<8x128xf32>
    %31 = arith.select %19, %30, %12 : vector<8x128xi1>, vector<8x128xf32>
    %c4 = arith.constant 4 : index
    %32 = memref.load %arg2[%c4] : memref<72xf32, #tpu.memory_space<smem>>
    %33 = vector.broadcast %32 : f32 to vector<8x128xf32>
    %34 = arith.select %19, %33, %13 : vector<8x128xi1>, vector<8x128xf32>
    %c5 = arith.constant 5 : index
    %35 = memref.load %arg2[%c5] : memref<72xf32, #tpu.memory_space<smem>>
    %36 = vector.broadcast %35 : f32 to vector<8x128xf32>
    %37 = arith.select %19, %36, %14 : vector<8x128xi1>, vector<8x128xf32>
    %c6 = arith.constant 6 : index
    %38 = memref.load %arg2[%c6] : memref<72xf32, #tpu.memory_space<smem>>
    %39 = vector.broadcast %38 : f32 to vector<8x128xf32>
    %40 = arith.select %19, %39, %15 : vector<8x128xi1>, vector<8x128xf32>
    %c7 = arith.constant 7 : index
    %41 = memref.load %arg2[%c7] : memref<72xf32, #tpu.memory_space<smem>>
    %42 = vector.broadcast %41 : f32 to vector<8x128xf32>
    %43 = arith.select %19, %42, %16 : vector<8x128xi1>, vector<8x128xf32>
    %c8 = arith.constant 8 : index
    %44 = memref.load %arg2[%c8] : memref<72xf32, #tpu.memory_space<smem>>
    %45 = vector.broadcast %44 : f32 to vector<8x128xf32>
    %46 = arith.select %19, %45, %17 : vector<8x128xi1>, vector<8x128xf32>
    %c1_i32 = arith.constant 1 : i32
    %47 = vector.broadcast %c1_i32 : i32 to vector<8x128xi32>
    %48 = arith.cmpi eq, %0, %47 : vector<8x128xi32>
    %c9 = arith.constant 9 : index
    %49 = memref.load %arg2[%c9] : memref<72xf32, #tpu.memory_space<smem>>
    %50 = vector.broadcast %49 : f32 to vector<8x128xf32>
    %51 = arith.select %48, %50, %22 : vector<8x128xi1>, vector<8x128xf32>
    %c10 = arith.constant 10 : index
    %52 = memref.load %arg2[%c10] : memref<72xf32, #tpu.memory_space<smem>>
    %53 = vector.broadcast %52 : f32 to vector<8x128xf32>
    %54 = arith.select %48, %53, %25 : vector<8x128xi1>, vector<8x128xf32>
    %c11 = arith.constant 11 : index
    %55 = memref.load %arg2[%c11] : memref<72xf32, #tpu.memory_space<smem>>
    %56 = vector.broadcast %55 : f32 to vector<8x128xf32>
    %57 = arith.select %48, %56, %28 : vector<8x128xi1>, vector<8x128xf32>
    %c12 = arith.constant 12 : index
    %58 = memref.load %arg2[%c12] : memref<72xf32, #tpu.memory_space<smem>>
    %59 = vector.broadcast %58 : f32 to vector<8x128xf32>
    %60 = arith.select %48, %59, %31 : vector<8x128xi1>, vector<8x128xf32>
    %c13 = arith.constant 13 : index
    %61 = memref.load %arg2[%c13] : memref<72xf32, #tpu.memory_space<smem>>
    %62 = vector.broadcast %61 : f32 to vector<8x128xf32>
    %63 = arith.select %48, %62, %34 : vector<8x128xi1>, vector<8x128xf32>
    %c14 = arith.constant 14 : index
    %64 = memref.load %arg2[%c14] : memref<72xf32, #tpu.memory_space<smem>>
    %65 = vector.broadcast %64 : f32 to vector<8x128xf32>
    %66 = arith.select %48, %65, %37 : vector<8x128xi1>, vector<8x128xf32>
    %c15 = arith.constant 15 : index
    %67 = memref.load %arg2[%c15] : memref<72xf32, #tpu.memory_space<smem>>
    %68 = vector.broadcast %67 : f32 to vector<8x128xf32>
    %69 = arith.select %48, %68, %40 : vector<8x128xi1>, vector<8x128xf32>
    %c16 = arith.constant 16 : index
    %70 = memref.load %arg2[%c16] : memref<72xf32, #tpu.memory_space<smem>>
    %71 = vector.broadcast %70 : f32 to vector<8x128xf32>
    %72 = arith.select %48, %71, %43 : vector<8x128xi1>, vector<8x128xf32>
    %c17 = arith.constant 17 : index
    %73 = memref.load %arg2[%c17] : memref<72xf32, #tpu.memory_space<smem>>
    %74 = vector.broadcast %73 : f32 to vector<8x128xf32>
    %75 = arith.select %48, %74, %46 : vector<8x128xi1>, vector<8x128xf32>
    %c2_i32 = arith.constant 2 : i32
    %76 = vector.broadcast %c2_i32 : i32 to vector<8x128xi32>
    %77 = arith.cmpi eq, %0, %76 : vector<8x128xi32>
    %c18 = arith.constant 18 : index
    %78 = memref.load %arg2[%c18] : memref<72xf32, #tpu.memory_space<smem>>
    %79 = vector.broadcast %78 : f32 to vector<8x128xf32>
    %80 = arith.select %77, %79, %51 : vector<8x128xi1>, vector<8x128xf32>
    %c19 = arith.constant 19 : index
    %81 = memref.load %arg2[%c19] : memref<72xf32, #tpu.memory_space<smem>>
    %82 = vector.broadcast %81 : f32 to vector<8x128xf32>
    %83 = arith.select %77, %82, %54 : vector<8x128xi1>, vector<8x128xf32>
    %c20 = arith.constant 20 : index
    %84 = memref.load %arg2[%c20] : memref<72xf32, #tpu.memory_space<smem>>
    %85 = vector.broadcast %84 : f32 to vector<8x128xf32>
    %86 = arith.select %77, %85, %57 : vector<8x128xi1>, vector<8x128xf32>
    %c21 = arith.constant 21 : index
    %87 = memref.load %arg2[%c21] : memref<72xf32, #tpu.memory_space<smem>>
    %88 = vector.broadcast %87 : f32 to vector<8x128xf32>
    %89 = arith.select %77, %88, %60 : vector<8x128xi1>, vector<8x128xf32>
    %c22 = arith.constant 22 : index
    %90 = memref.load %arg2[%c22] : memref<72xf32, #tpu.memory_space<smem>>
    %91 = vector.broadcast %90 : f32 to vector<8x128xf32>
    %92 = arith.select %77, %91, %63 : vector<8x128xi1>, vector<8x128xf32>
    %c23 = arith.constant 23 : index
    %93 = memref.load %arg2[%c23] : memref<72xf32, #tpu.memory_space<smem>>
    %94 = vector.broadcast %93 : f32 to vector<8x128xf32>
    %95 = arith.select %77, %94, %66 : vector<8x128xi1>, vector<8x128xf32>
    %c24 = arith.constant 24 : index
    %96 = memref.load %arg2[%c24] : memref<72xf32, #tpu.memory_space<smem>>
    %97 = vector.broadcast %96 : f32 to vector<8x128xf32>
    %98 = arith.select %77, %97, %69 : vector<8x128xi1>, vector<8x128xf32>
    %c25 = arith.constant 25 : index
    %99 = memref.load %arg2[%c25] : memref<72xf32, #tpu.memory_space<smem>>
    %100 = vector.broadcast %99 : f32 to vector<8x128xf32>
    %101 = arith.select %77, %100, %72 : vector<8x128xi1>, vector<8x128xf32>
    %c26 = arith.constant 26 : index
    %102 = memref.load %arg2[%c26] : memref<72xf32, #tpu.memory_space<smem>>
    %103 = vector.broadcast %102 : f32 to vector<8x128xf32>
    %104 = arith.select %77, %103, %75 : vector<8x128xi1>, vector<8x128xf32>
    %c3_i32 = arith.constant 3 : i32
    %105 = vector.broadcast %c3_i32 : i32 to vector<8x128xi32>
    %106 = arith.cmpi eq, %0, %105 : vector<8x128xi32>
    %c27 = arith.constant 27 : index
    %107 = memref.load %arg2[%c27] : memref<72xf32, #tpu.memory_space<smem>>
    %108 = vector.broadcast %107 : f32 to vector<8x128xf32>
    %109 = arith.select %106, %108, %80 : vector<8x128xi1>, vector<8x128xf32>
    %c28 = arith.constant 28 : index
    %110 = memref.load %arg2[%c28] : memref<72xf32, #tpu.memory_space<smem>>
    %111 = vector.broadcast %110 : f32 to vector<8x128xf32>
    %112 = arith.select %106, %111, %83 : vector<8x128xi1>, vector<8x128xf32>
    %c29 = arith.constant 29 : index
    %113 = memref.load %arg2[%c29] : memref<72xf32, #tpu.memory_space<smem>>
    %114 = vector.broadcast %113 : f32 to vector<8x128xf32>
    %115 = arith.select %106, %114, %86 : vector<8x128xi1>, vector<8x128xf32>
    %c30 = arith.constant 30 : index
    %116 = memref.load %arg2[%c30] : memref<72xf32, #tpu.memory_space<smem>>
    %117 = vector.broadcast %116 : f32 to vector<8x128xf32>
    %118 = arith.select %106, %117, %89 : vector<8x128xi1>, vector<8x128xf32>
    %c31 = arith.constant 31 : index
    %119 = memref.load %arg2[%c31] : memref<72xf32, #tpu.memory_space<smem>>
    %120 = vector.broadcast %119 : f32 to vector<8x128xf32>
    %121 = arith.select %106, %120, %92 : vector<8x128xi1>, vector<8x128xf32>
    %c32 = arith.constant 32 : index
    %122 = memref.load %arg2[%c32] : memref<72xf32, #tpu.memory_space<smem>>
    %123 = vector.broadcast %122 : f32 to vector<8x128xf32>
    %124 = arith.select %106, %123, %95 : vector<8x128xi1>, vector<8x128xf32>
    %c33 = arith.constant 33 : index
    %125 = memref.load %arg2[%c33] : memref<72xf32, #tpu.memory_space<smem>>
    %126 = vector.broadcast %125 : f32 to vector<8x128xf32>
    %127 = arith.select %106, %126, %98 : vector<8x128xi1>, vector<8x128xf32>
    %c34 = arith.constant 34 : index
    %128 = memref.load %arg2[%c34] : memref<72xf32, #tpu.memory_space<smem>>
    %129 = vector.broadcast %128 : f32 to vector<8x128xf32>
    %130 = arith.select %106, %129, %101 : vector<8x128xi1>, vector<8x128xf32>
    %c35 = arith.constant 35 : index
    %131 = memref.load %arg2[%c35] : memref<72xf32, #tpu.memory_space<smem>>
    %132 = vector.broadcast %131 : f32 to vector<8x128xf32>
    %133 = arith.select %106, %132, %104 : vector<8x128xi1>, vector<8x128xf32>
    %c4_i32 = arith.constant 4 : i32
    %134 = vector.broadcast %c4_i32 : i32 to vector<8x128xi32>
    %135 = arith.cmpi eq, %0, %134 : vector<8x128xi32>
    %c36 = arith.constant 36 : index
    %136 = memref.load %arg2[%c36] : memref<72xf32, #tpu.memory_space<smem>>
    %137 = vector.broadcast %136 : f32 to vector<8x128xf32>
    %138 = arith.select %135, %137, %109 : vector<8x128xi1>, vector<8x128xf32>
    %c37 = arith.constant 37 : index
    %139 = memref.load %arg2[%c37] : memref<72xf32, #tpu.memory_space<smem>>
    %140 = vector.broadcast %139 : f32 to vector<8x128xf32>
    %141 = arith.select %135, %140, %112 : vector<8x128xi1>, vector<8x128xf32>
    %c38 = arith.constant 38 : index
    %142 = memref.load %arg2[%c38] : memref<72xf32, #tpu.memory_space<smem>>
    %143 = vector.broadcast %142 : f32 to vector<8x128xf32>
    %144 = arith.select %135, %143, %115 : vector<8x128xi1>, vector<8x128xf32>
    %c39 = arith.constant 39 : index
    %145 = memref.load %arg2[%c39] : memref<72xf32, #tpu.memory_space<smem>>
    %146 = vector.broadcast %145 : f32 to vector<8x128xf32>
    %147 = arith.select %135, %146, %118 : vector<8x128xi1>, vector<8x128xf32>
    %c40 = arith.constant 40 : index
    %148 = memref.load %arg2[%c40] : memref<72xf32, #tpu.memory_space<smem>>
    %149 = vector.broadcast %148 : f32 to vector<8x128xf32>
    %150 = arith.select %135, %149, %121 : vector<8x128xi1>, vector<8x128xf32>
    %c41 = arith.constant 41 : index
    %151 = memref.load %arg2[%c41] : memref<72xf32, #tpu.memory_space<smem>>
    %152 = vector.broadcast %151 : f32 to vector<8x128xf32>
    %153 = arith.select %135, %152, %124 : vector<8x128xi1>, vector<8x128xf32>
    %c42 = arith.constant 42 : index
    %154 = memref.load %arg2[%c42] : memref<72xf32, #tpu.memory_space<smem>>
    %155 = vector.broadcast %154 : f32 to vector<8x128xf32>
    %156 = arith.select %135, %155, %127 : vector<8x128xi1>, vector<8x128xf32>
    %c43 = arith.constant 43 : index
    %157 = memref.load %arg2[%c43] : memref<72xf32, #tpu.memory_space<smem>>
    %158 = vector.broadcast %157 : f32 to vector<8x128xf32>
    %159 = arith.select %135, %158, %130 : vector<8x128xi1>, vector<8x128xf32>
    %c44 = arith.constant 44 : index
    %160 = memref.load %arg2[%c44] : memref<72xf32, #tpu.memory_space<smem>>
    %161 = vector.broadcast %160 : f32 to vector<8x128xf32>
    %162 = arith.select %135, %161, %133 : vector<8x128xi1>, vector<8x128xf32>
    %c5_i32 = arith.constant 5 : i32
    %163 = vector.broadcast %c5_i32 : i32 to vector<8x128xi32>
    %164 = arith.cmpi eq, %0, %163 : vector<8x128xi32>
    %c45 = arith.constant 45 : index
    %165 = memref.load %arg2[%c45] : memref<72xf32, #tpu.memory_space<smem>>
    %166 = vector.broadcast %165 : f32 to vector<8x128xf32>
    %167 = arith.select %164, %166, %138 : vector<8x128xi1>, vector<8x128xf32>
    %c46 = arith.constant 46 : index
    %168 = memref.load %arg2[%c46] : memref<72xf32, #tpu.memory_space<smem>>
    %169 = vector.broadcast %168 : f32 to vector<8x128xf32>
    %170 = arith.select %164, %169, %141 : vector<8x128xi1>, vector<8x128xf32>
    %c47 = arith.constant 47 : index
    %171 = memref.load %arg2[%c47] : memref<72xf32, #tpu.memory_space<smem>>
    %172 = vector.broadcast %171 : f32 to vector<8x128xf32>
    %173 = arith.select %164, %172, %144 : vector<8x128xi1>, vector<8x128xf32>
    %c48 = arith.constant 48 : index
    %174 = memref.load %arg2[%c48] : memref<72xf32, #tpu.memory_space<smem>>
    %175 = vector.broadcast %174 : f32 to vector<8x128xf32>
    %176 = arith.select %164, %175, %147 : vector<8x128xi1>, vector<8x128xf32>
    %c49 = arith.constant 49 : index
    %177 = memref.load %arg2[%c49] : memref<72xf32, #tpu.memory_space<smem>>
    %178 = vector.broadcast %177 : f32 to vector<8x128xf32>
    %179 = arith.select %164, %178, %150 : vector<8x128xi1>, vector<8x128xf32>
    %c50 = arith.constant 50 : index
    %180 = memref.load %arg2[%c50] : memref<72xf32, #tpu.memory_space<smem>>
    %181 = vector.broadcast %180 : f32 to vector<8x128xf32>
    %182 = arith.select %164, %181, %153 : vector<8x128xi1>, vector<8x128xf32>
    %c51 = arith.constant 51 : index
    %183 = memref.load %arg2[%c51] : memref<72xf32, #tpu.memory_space<smem>>
    %184 = vector.broadcast %183 : f32 to vector<8x128xf32>
    %185 = arith.select %164, %184, %156 : vector<8x128xi1>, vector<8x128xf32>
    %c52 = arith.constant 52 : index
    %186 = memref.load %arg2[%c52] : memref<72xf32, #tpu.memory_space<smem>>
    %187 = vector.broadcast %186 : f32 to vector<8x128xf32>
    %188 = arith.select %164, %187, %159 : vector<8x128xi1>, vector<8x128xf32>
    %c53 = arith.constant 53 : index
    %189 = memref.load %arg2[%c53] : memref<72xf32, #tpu.memory_space<smem>>
    %190 = vector.broadcast %189 : f32 to vector<8x128xf32>
    %191 = arith.select %164, %190, %162 : vector<8x128xi1>, vector<8x128xf32>
    %c6_i32 = arith.constant 6 : i32
    %192 = vector.broadcast %c6_i32 : i32 to vector<8x128xi32>
    %193 = arith.cmpi eq, %0, %192 : vector<8x128xi32>
    %c54 = arith.constant 54 : index
    %194 = memref.load %arg2[%c54] : memref<72xf32, #tpu.memory_space<smem>>
    %195 = vector.broadcast %194 : f32 to vector<8x128xf32>
    %196 = arith.select %193, %195, %167 : vector<8x128xi1>, vector<8x128xf32>
    %c55 = arith.constant 55 : index
    %197 = memref.load %arg2[%c55] : memref<72xf32, #tpu.memory_space<smem>>
    %198 = vector.broadcast %197 : f32 to vector<8x128xf32>
    %199 = arith.select %193, %198, %170 : vector<8x128xi1>, vector<8x128xf32>
    %c56 = arith.constant 56 : index
    %200 = memref.load %arg2[%c56] : memref<72xf32, #tpu.memory_space<smem>>
    %201 = vector.broadcast %200 : f32 to vector<8x128xf32>
    %202 = arith.select %193, %201, %173 : vector<8x128xi1>, vector<8x128xf32>
    %c57 = arith.constant 57 : index
    %203 = memref.load %arg2[%c57] : memref<72xf32, #tpu.memory_space<smem>>
    %204 = vector.broadcast %203 : f32 to vector<8x128xf32>
    %205 = arith.select %193, %204, %176 : vector<8x128xi1>, vector<8x128xf32>
    %c58 = arith.constant 58 : index
    %206 = memref.load %arg2[%c58] : memref<72xf32, #tpu.memory_space<smem>>
    %207 = vector.broadcast %206 : f32 to vector<8x128xf32>
    %208 = arith.select %193, %207, %179 : vector<8x128xi1>, vector<8x128xf32>
    %c59 = arith.constant 59 : index
    %209 = memref.load %arg2[%c59] : memref<72xf32, #tpu.memory_space<smem>>
    %210 = vector.broadcast %209 : f32 to vector<8x128xf32>
    %211 = arith.select %193, %210, %182 : vector<8x128xi1>, vector<8x128xf32>
    %c60 = arith.constant 60 : index
    %212 = memref.load %arg2[%c60] : memref<72xf32, #tpu.memory_space<smem>>
    %213 = vector.broadcast %212 : f32 to vector<8x128xf32>
    %214 = arith.select %193, %213, %185 : vector<8x128xi1>, vector<8x128xf32>
    %c61 = arith.constant 61 : index
    %215 = memref.load %arg2[%c61] : memref<72xf32, #tpu.memory_space<smem>>
    %216 = vector.broadcast %215 : f32 to vector<8x128xf32>
    %217 = arith.select %193, %216, %188 : vector<8x128xi1>, vector<8x128xf32>
    %c62 = arith.constant 62 : index
    %218 = memref.load %arg2[%c62] : memref<72xf32, #tpu.memory_space<smem>>
    %219 = vector.broadcast %218 : f32 to vector<8x128xf32>
    %220 = arith.select %193, %219, %191 : vector<8x128xi1>, vector<8x128xf32>
    %c7_i32 = arith.constant 7 : i32
    %221 = vector.broadcast %c7_i32 : i32 to vector<8x128xi32>
    %222 = arith.cmpi eq, %0, %221 : vector<8x128xi32>
    %c63 = arith.constant 63 : index
    %223 = memref.load %arg2[%c63] : memref<72xf32, #tpu.memory_space<smem>>
    %224 = vector.broadcast %223 : f32 to vector<8x128xf32>
    %225 = arith.select %222, %224, %196 : vector<8x128xi1>, vector<8x128xf32>
    %c64 = arith.constant 64 : index
    %226 = memref.load %arg2[%c64] : memref<72xf32, #tpu.memory_space<smem>>
    %227 = vector.broadcast %226 : f32 to vector<8x128xf32>
    %228 = arith.select %222, %227, %199 : vector<8x128xi1>, vector<8x128xf32>
    %c65 = arith.constant 65 : index
    %229 = memref.load %arg2[%c65] : memref<72xf32, #tpu.memory_space<smem>>
    %230 = vector.broadcast %229 : f32 to vector<8x128xf32>
    %231 = arith.select %222, %230, %202 : vector<8x128xi1>, vector<8x128xf32>
    %c66 = arith.constant 66 : index
    %232 = memref.load %arg2[%c66] : memref<72xf32, #tpu.memory_space<smem>>
    %233 = vector.broadcast %232 : f32 to vector<8x128xf32>
    %234 = arith.select %222, %233, %205 : vector<8x128xi1>, vector<8x128xf32>
    %c67 = arith.constant 67 : index
    %235 = memref.load %arg2[%c67] : memref<72xf32, #tpu.memory_space<smem>>
    %236 = vector.broadcast %235 : f32 to vector<8x128xf32>
    %237 = arith.select %222, %236, %208 : vector<8x128xi1>, vector<8x128xf32>
    %c68 = arith.constant 68 : index
    %238 = memref.load %arg2[%c68] : memref<72xf32, #tpu.memory_space<smem>>
    %239 = vector.broadcast %238 : f32 to vector<8x128xf32>
    %240 = arith.select %222, %239, %211 : vector<8x128xi1>, vector<8x128xf32>
    %c69 = arith.constant 69 : index
    %241 = memref.load %arg2[%c69] : memref<72xf32, #tpu.memory_space<smem>>
    %242 = vector.broadcast %241 : f32 to vector<8x128xf32>
    %243 = arith.select %222, %242, %214 : vector<8x128xi1>, vector<8x128xf32>
    %c70 = arith.constant 70 : index
    %244 = memref.load %arg2[%c70] : memref<72xf32, #tpu.memory_space<smem>>
    %245 = vector.broadcast %244 : f32 to vector<8x128xf32>
    %246 = arith.select %222, %245, %217 : vector<8x128xi1>, vector<8x128xf32>
    %c71 = arith.constant 71 : index
    %247 = memref.load %arg2[%c71] : memref<72xf32, #tpu.memory_space<smem>>
    %248 = vector.broadcast %247 : f32 to vector<8x128xf32>
    %249 = arith.select %222, %248, %220 : vector<8x128xi1>, vector<8x128xf32>
    %250 = arith.mulf %225, %4 : vector<8x128xf32>
    %251 = arith.mulf %234, %6 : vector<8x128xf32>
    %252 = arith.addf %250, %251 : vector<8x128xf32>
    %253 = arith.mulf %243, %8 : vector<8x128xf32>
    %254 = arith.addf %252, %253 : vector<8x128xf32>
    %c0_20 = arith.constant 0 : index
    %255 = memref.load %arg1[%c0_20] : memref<3xf32, #tpu.memory_space<smem>>
    %256 = vector.broadcast %255 : f32 to vector<8x128xf32>
    %257 = arith.select %2, %256, %254 : vector<8x128xi1>, vector<8x128xf32>
    %c0_21 = arith.constant 0 : index
    %c0_22 = arith.constant 0 : index
    %c0_23 = arith.constant 0 : index
    %258 = vector.load %arg5[%c0_21, %c0_22, %c0_23] : memref<4x8x128xf32, #tpu.memory_space<vmem>>, vector<1x8x128xf32>
    %259 = vector.shape_cast %258 : vector<1x8x128xf32> to vector<8x128xf32>
    %260 = vector.shape_cast %257 : vector<8x128xf32> to vector<1x8x128xf32>
    tpu.vector_store %arg5[%c0_21, %c0_22, %c0_23], %260 {strides = array<i32>} : memref<4x8x128xf32, #tpu.memory_space<vmem>>, vector<1x8x128xf32>,
    %261 = arith.mulf %228, %4 : vector<8x128xf32>
    %262 = arith.mulf %237, %6 : vector<8x128xf32>
    %263 = arith.addf %261, %262 : vector<8x128xf32>
    %264 = arith.mulf %246, %8 : vector<8x128xf32>
    %265 = arith.addf %263, %264 : vector<8x128xf32>
    %c1_24 = arith.constant 1 : index
    %266 = memref.load %arg1[%c1_24] : memref<3xf32, #tpu.memory_space<smem>>
    %267 = vector.broadcast %266 : f32 to vector<8x128xf32>
    %268 = arith.select %2, %267, %265 : vector<8x128xi1>, vector<8x128xf32>
    %c1_25 = arith.constant 1 : index
    %c0_26 = arith.constant 0 : index
    %c0_27 = arith.constant 0 : index
    %269 = vector.load %arg5[%c1_25, %c0_26, %c0_27] : memref<4x8x128xf32, #tpu.memory_space<vmem>>, vector<1x8x128xf32>
    %270 = vector.shape_cast %269 : vector<1x8x128xf32> to vector<8x128xf32>
    %271 = vector.shape_cast %268 : vector<8x128xf32> to vector<1x8x128xf32>
    tpu.vector_store %arg5[%c1_25, %c0_26, %c0_27], %271 {strides = array<i32>} : memref<4x8x128xf32, #tpu.memory_space<vmem>>, vector<1x8x128xf32>,
    %272 = arith.mulf %231, %4 : vector<8x128xf32>
    %273 = arith.mulf %240, %6 : vector<8x128xf32>
    %274 = arith.addf %272, %273 : vector<8x128xf32>
    %275 = arith.mulf %249, %8 : vector<8x128xf32>
    %276 = arith.addf %274, %275 : vector<8x128xf32>
    %c2_28 = arith.constant 2 : index
    %277 = memref.load %arg1[%c2_28] : memref<3xf32, #tpu.memory_space<smem>>
    %278 = vector.broadcast %277 : f32 to vector<8x128xf32>
    %279 = arith.select %2, %278, %276 : vector<8x128xi1>, vector<8x128xf32>
    %c2_29 = arith.constant 2 : index
    %c0_30 = arith.constant 0 : index
    %c0_31 = arith.constant 0 : index
    %280 = vector.load %arg5[%c2_29, %c0_30, %c0_31] : memref<4x8x128xf32, #tpu.memory_space<vmem>>, vector<1x8x128xf32>
    %281 = vector.shape_cast %280 : vector<1x8x128xf32> to vector<8x128xf32>
    %282 = vector.shape_cast %279 : vector<8x128xf32> to vector<1x8x128xf32>
    tpu.vector_store %arg5[%c2_29, %c0_30, %c0_31], %282 {strides = array<i32>} : memref<4x8x128xf32, #tpu.memory_space<vmem>>, vector<1x8x128xf32>,
    %cst_32 = arith.constant 0.000000e+00 : f32
    %cst_33 = arith.constant 1.000000e+00 : f32
    %283 = vector.broadcast %cst_32 : f32 to vector<8x128xf32>
    %284 = vector.broadcast %cst_33 : f32 to vector<8x128xf32>
    %285 = arith.select %2, %283, %284 : vector<8x128xi1>, vector<8x128xf32>
    %c3_34 = arith.constant 3 : index
    %c0_35 = arith.constant 0 : index
    %c0_36 = arith.constant 0 : index
    %286 = vector.load %arg5[%c3_34, %c0_35, %c0_36] : memref<4x8x128xf32, #tpu.memory_space<vmem>>, vector<1x8x128xf32>
    %287 = vector.shape_cast %286 : vector<1x8x128xf32> to vector<8x128xf32>
    %288 = vector.shape_cast %285 : vector<8x128xf32> to vector<1x8x128xf32>
    tpu.vector_store %arg5[%c3_34, %c0_35, %c0_36], %288 {strides = array<i32>} : memref<4x8x128xf32, #tpu.memory_space<vmem>>, vector<1x8x128xf32>,
    return
  }
  func.func @transform_0(%arg0: i32) -> i32 {
    %c0_i32 = arith.constant 0 : i32
    %c0_i32_0 = arith.constant 0 : i32
    return %c0_i32 : i32
  }
  func.func @transform_1(%arg0: i32) -> i32 {
    %c0_i32 = arith.constant 0 : i32
    %c0_i32_0 = arith.constant 0 : i32
    return %c0_i32 : i32
  }
  func.func @transform_2(%arg0: i32) -> (i32, i32, i32) {
    %c0_i32 = arith.constant 0 : i32
    %c0_i32_0 = arith.constant 0 : i32
    %c0_i32_1 = arith.constant 0 : i32
    return %c0_i32, %arg0, %c0_i32_0 : i32, i32, i32
  }
  func.func @transform_3(%arg0: i32) -> (i32, i32) {
    %c0_i32 = arith.constant 0 : i32
    %c0_i32_0 = arith.constant 0 : i32
    return %arg0, %c0_i32 : i32, i32
  }
  func.func @transform_4(%arg0: i32) -> (i32, i32, i32) {
    %c0_i32 = arith.constant 0 : i32
    %c0_i32_0 = arith.constant 0 : i32
    %c0_i32_1 = arith.constant 0 : i32
    return %c0_i32, %arg0, %c0_i32_0 : i32, i32, i32
  }
}

</mosaic_0001>

<llo_original>
// kernel: squeeze.2
$region0: #{squeeze.2}
  %s0 = inlined_call_operand.vmem [shape: s32[2,16,16], index: 0, kind: input, shape index: {}]
  %s1 = inlined_call_operand.vmem [shape: s32[512], index: 1, kind: output, shape index: {}]
  $region1: #{squeeze.2} parent=0
    #allocation0 [shape = 'u8[4096]{0}', space=vmem, size = 0x1000, scoped, tag = 'scoped mem for output reshape']
    %v2 = vld [vmem:[%s0] ss:$8 sm:$0xf]
    %vm3 = vcmask 130048
    %4 = vst.msk [vmem:[#allocation0] sm:$0xf] %vm3, %v2
    %s5 = scalar_lea.vmem %s0, 7
    %v6 = vld [vmem:[%s5] ss:$8 sm:$0xf]
    %7 = vrot.lane.b32.xlu0 %v6, 112
    %v8 = vpop.permute.xlu0 %7
    %vm9 = vcmask 1048448
    %10 = vst.msk [vmem:[#allocation0] sm:$0xf] %vm9, %v8
    %s11 = scalar_lea.vmem %s0, 6
    %v12 = vld [vmem:[%s11] ss:$8 sm:$0xf]
    %13 = vrot.lane.b32.xlu0 %v12, 96
    %v14 = vpop.permute.xlu0 %13
    %vm15 = vcmask 917248
    %16 = vst.msk [vmem:[#allocation0] sm:$0xf] %vm15, %v14
    %s17 = scalar_lea.vmem %s0, 5
    %v18 = vld [vmem:[%s17] ss:$8 sm:$0xf]
    %19 = vrot.lane.b32.xlu0 %v18, 80
    %v20 = vpop.permute.xlu0 %19
    %vm21 = vcmask 786048
    %22 = vst.msk [vmem:[#allocation0] sm:$0xf] %vm21, %v20
    %s23 = scalar_lea.vmem %s0, 4
    %v24 = vld [vmem:[%s23] ss:$8 sm:$0xf]
    %25 = vrot.lane.b32.xlu0 %v24, 64
    %v26 = vpop.permute.xlu0 %25
    %vm27 = vcmask 654848
    %28 = vst.msk [vmem:[#allocation0] sm:$0xf] %vm27, %v26
    %s29 = scalar_lea.vmem %s0, 3
    %v30 = vld [vmem:[%s29] ss:$8 sm:$0xf]
    %31 = vrot.lane.b32.xlu0 %v30, 48
    %v32 = vpop.permute.xlu0 %31
    %vm33 = vcmask 523648
    %34 = vst.msk [vmem:[#allocation0] sm:$0xf] %vm33, %v32
    %s35 = scalar_lea.vmem %s0, 2
    %v36 = vld [vmem:[%s35] ss:$8 sm:$0xf]
    %37 = vrot.lane.b32.xlu0 %v36, 32
    %v38 = vpop.permute.xlu0 %37
    %vm39 = vcmask 392448
    %40 = vst.msk [vmem:[#allocation0] sm:$0xf] %vm39, %v38
    %s41 = scalar_lea.vmem %s0, 1
    %v42 = vld [vmem:[%s41] ss:$8 sm:$0xf]
    %43 = vrot.lane.b32.xlu0 %v42, 16
    %v44 = vpop.permute.xlu0 %43
    %vm45 = vcmask 261248
    %46 = vst.msk [vmem:[#allocation0] sm:$0xf] %vm45, %v44
    %s48 = sshllo.u32 0, 4
    %v50 = vld [vmem:[#allocation0] sm:%s48]
    %s51 = sshllo.u32 0, 4
    %52 = vst [vmem:[%s1] sm:%s51] %v50

// kernel: squeeze.3
$region0: #{squeeze.3}
  %s0 = inlined_call_operand.vmem [shape: f32[2,16,16,1,3], index: 0, kind: input, shape index: {}]
  %s1 = inlined_call_operand.vmem [shape: f32[512,3], index: 1, kind: output, shape index: {}]
  $region1: #{squeeze.3} parent=0
    #allocation0 [shape = 'u8[16384]{0}', space=vmem, size = 0x4000, scoped, tag = 'scoped mem for output reshape']
    %v2 = vld [vmem:[%s0] ss:$8 sm:$0xf]
    %v3 = vld [vmem:[%s0] ss:$8 sm:$0xf0]
    %vm4 = vcmask 1047556
    %v5 = vsel %vm4, %v3, %v2
    %vm6 = vcmask 130048
    %7 = vst.msk [vmem:[#allocation0] ss:$8 sm:$0xf] %vm6, %v5
    %s8 = scalar_lea.vmem [#allocation0], 4294967265
    %9 = vst.msk [vmem:[%s8] ss:$8 sm:$0xf0] %vm6, %v5
    %s10 = scalar_lea.vmem %s0, 64
    %v11 = vld [vmem:[%s10] ss:$8 sm:$0xf]
    %vm12 = vcmask 130048
    %s13 = scalar_lea.vmem [#allocation0], 2
    %14 = vst.msk [vmem:[%s13] ss:$8 sm:$0xf] %vm12, %v11
    %s15 = scalar_lea.vmem %s0, 7
    %v16 = vld [vmem:[%s15] sm:$0x1]
    %s17 = scalar_lea.vmem %s0, 38
    %v18 = vld [vmem:[%s17] sm:$0x2]
    %vm19 = vcmask 1041409
    %v20 = vsel %vm19, %v18, %v16
    %s21 = scalar_lea.vmem %s0, 183
    %s22 = smov 12
    %v23 = vld [vmem:[%s21] ss:$-56 sm:%s22]
    %vm24 = vcmask 1043458
    %v25 = vsel %vm24, %v23, %v20
    %s26 = scalar_lea.vmem %s0, 43
    %v27 = vld [vmem:[%s26] sm:$0x10]
    %vm28 = vcmask 1044484
    %v29 = vsel %vm28, %v27, %v25
    %s30 = scalar_lea.vmem %s0, 359
    %s31 = smov 96
    %v32 = vld [vmem:[%s30] ss:$-56 sm:%s31]
    %vm33 = vcmask 1046533
    %v34 = vsel %vm33, %v32, %v29
    %s35 = scalar_lea.vmem %s0, 48
    %v36 = vld [vmem:[%s35] sm:$0x80]
    %vm37 = vcmask 1047559
    %v38 = vsel %vm37, %v36, %v34
    %39 = vrot.lane.b32.xlu0 %v38, 112
    %v40 = vpop.permute.xlu0 %39
    %vm41 = vcmask 1048448
    %42 = vst.msk [vmem:[#allocation0] sm:$0x7] %vm41, %v40
    %s43 = scalar_lea.vmem [#allocation0], 5
    %44 = vst.msk [vmem:[%s43] sm:$0x38] %vm41, %v40
    %s45 = scalar_lea.vmem [#allocation0], 10
    %46 = vst.msk [vmem:[%s45] sm:$0xc0] %vm41, %v40
    %s47 = scalar_lea.vmem %s0, 87
    %s48 = smov 3
    %v49 = vld [vmem:[%s47] ss:$-56 sm:%s48]
    %s50 = scalar_lea.vmem %s0, 61
    %v51 = vld [vmem:[%s50] sm:$0x4]
    %vm52 = vcmask 1042434
    %v53 = vsel %vm52, %v51, %v49
    %s54 = scalar_lea.vmem %s0, 92
    %v55 = vld [vmem:[%s54] sm:$0x8]
    %vm56 = vcmask 1043459
    %v57 = vsel %vm56, %v55, %v53
    %58 = vrot.lane.b32.xlu0 %v57, 112
    %v59 = vpop.permute.xlu0 %58
    %vm60 = vcmask 1048448
    %s61 = scalar_lea.vmem [#allocation0], 18
    %62 = vst.msk [vmem:[%s61] ss:$6 sm:$0x3] %vm60, %v59
    %s63 = scalar_lea.vmem [#allocation0], 23
    %64 = vst.msk [vmem:[%s63] sm:$0xc] %vm60, %v59
    %s65 = scalar_lea.vmem %s0, 6
    %v66 = vld [vmem:[%s65] sm:$0x1]
    %s67 = scalar_lea.vmem %s0, 37
    %v68 = vld [vmem:[%s67] sm:$0x2]
    %vm69 = vcmask 1041409
    %v70 = vsel %vm69, %v68, %v66
    %s71 = scalar_lea.vmem %s0, 182
    %s72 = smov 12
    %v73 = vld [vmem:[%s71] ss:$-56 sm:%s72]
    %vm74 = vcmask 1043458
    %v75 = vsel %vm74, %v73, %v70
    %s76 = scalar_lea.vmem %s0, 42
    %v77 = vld [vmem:[%s76] sm:$0x10]
    %vm78 = vcmask 1044484
    %v79 = vsel %vm78, %v77, %v75
    %s80 = scalar_lea.vmem %s0, 358
    %s81 = smov 96
    %v82 = vld [vmem:[%s80] ss:$-56 sm:%s81]
    %vm83 = vcmask 1046533
    %v84 = vsel %vm83, %v82, %v79
    %s85 = scalar_lea.vmem %s0, 47
    %v86 = vld [vmem:[%s85] sm:$0x80]
    %vm87 = vcmask 1047559
    %v88 = vsel %vm87, %v86, %v84
    %89 = vrot.lane.b32.xlu0 %v88, 96
    %v90 = vpop.permute.xlu0 %89
    %vm91 = vcmask 917248
    %92 = vst.msk [vmem:[#allocation0] sm:$0x7] %vm91, %v90
    %s93 = scalar_lea.vmem [#allocation0], 5
    %94 = vst.msk [vmem:[%s93] sm:$0x38] %vm91, %v90
    %s95 = scalar_lea.vmem [#allocation0], 10
    %96 = vst.msk [vmem:[%s95] sm:$0xc0] %vm91, %v90
    %s97 = scalar_lea.vmem %s0, 86
    %s98 = smov 3
    %v99 = vld [vmem:[%s97] ss:$-56 sm:%s98]
    %s100 = scalar_lea.vmem %s0, 60
    %v101 = vld [vmem:[%s100] sm:$0x4]
    %vm102 = vcmask 1042434
    %v103 = vsel %vm102, %v101, %v99
    %s104 = scalar_lea.vmem %s0, 91
    %v105 = vld [vmem:[%s104] sm:$0x8]
    %vm106 = vcmask 1043459
    %v107 = vsel %vm106, %v105, %v103
    %108 = vrot.lane.b32.xlu0 %v107, 96
    %v109 = vpop.permute.xlu0 %108
    %vm110 = vcmask 917248
    %s111 = scalar_lea.vmem [#allocation0], 18
    %112 = vst.msk [vmem:[%s111] ss:$6 sm:$0x3] %vm110, %v109
    %s113 = scalar_lea.vmem [#allocation0], 23
    %114 = vst.msk [vmem:[%s113] sm:$0xc] %vm110, %v109
    %s115 = scalar_lea.vmem %s0, 5
    %v116 = vld [vmem:[%s115] sm:$0x1]
    %s117 = scalar_lea.vmem %s0, 36
    %v118 = vld [vmem:[%s117] sm:$0x2]
    %vm119 = vcmask 1041409
    %v120 = vsel %vm119, %v118, %v116
    %s121 = scalar_lea.vmem %s0, 181
    %s122 = smov 12
    %v123 = vld [vmem:[%s121] ss:$-56 sm:%s122]
    %vm124 = vcmask 1043458
    %v125 = vsel %vm124, %v123, %v120
    %s126 = scalar_lea.vmem %s0, 41
    %v127 = vld [vmem:[%s126] sm:$0x10]
    %vm128 = vcmask 1044484
    %v129 = vsel %vm128, %v127, %v125
    %s130 = scalar_lea.vmem %s0, 357
    %s131 = smov 96
    %v132 = vld [vmem:[%s130] ss:$-56 sm:%s131]
    %vm133 = vcmask 1046533
    %v134 = vsel %vm133, %v132, %v129
    %s135 = scalar_lea.vmem %s0, 46
    %v136 = vld [vmem:[%s135] sm:$0x80]
    %vm137 = vcmask 1047559
    %v138 = vsel %vm137, %v136, %v134
    %139 = vrot.lane.b32.xlu0 %v138, 80
    %v140 = vpop.permute.xlu0 %139
    %vm141 = vcmask 786048
    %142 = vst.msk [vmem:[#allocation0] sm:$0x7] %vm141, %v140
    %s143 = scalar_lea.vmem [#allocation0], 5
    %144 = vst.msk [vmem:[%s143] sm:$0x38] %vm141, %v140
    %s145 = scalar_lea.vmem [#allocation0], 10
    %146 = vst.msk [vmem:[%s145] sm:$0xc0] %vm141, %v140
    %s147 = scalar_lea.vmem %s0, 85
    %s148 = smov 3
    %v149 = vld [vmem:[%s147] ss:$-56 sm:%s148]
    %s150 = scalar_lea.vmem %s0, 59
    %v151 = vld [vmem:[%s150] sm:$0x4]
    %vm152 = vcmask 1042434
    %v153 = vsel %vm152, %v151, %v149
    %s154 = scalar_lea.vmem %s0, 90
    %v155 = vld [vmem:[%s154] sm:$0x8]
    %vm156 = vcmask 1043459
    %v157 = vsel %vm156, %v155, %v153
    %158 = vrot.lane.b32.xlu0 %v157, 80
    %v159 = vpop.permute.xlu0 %158
    %vm160 = vcmask 786048
    %s161 = scalar_lea.vmem [#allocation0], 18
    %162 = vst.msk [vmem:[%s161] ss:$6 sm:$0x3] %vm160, %v159
    %s163 = scalar_lea.vmem [#allocation0], 23
    %164 = vst.msk [vmem:[%s163] sm:$0xc] %vm160, %v159
    %s165 = scalar_lea.vmem %s0, 4
    %v166 = vld [vmem:[%s165] sm:$0x1]
    %s167 = scalar_lea.vmem %s0, 35
    %v168 = vld [vmem:[%s167] sm:$0x2]
    %vm169 = vcmask 1041409
    %v170 = vsel %vm169, %v168, %v166
    %s171 = scalar_lea.vmem %s0, 180
    %s172 = smov 12
    %v173 = vld [vmem:[%s171] ss:$-56 sm:%s172]
    %vm174 = vcmask 1043458
    %v175 = vsel %vm174, %v173, %v170
    %s176 = scalar_lea.vmem %s0, 40
    %v177 = vld [vmem:[%s176] sm:$0x10]
    %vm178 = vcmask 1044484
    %v179 = vsel %vm178, %v177, %v175
    %s180 = scalar_lea.vmem %s0, 356
    %s181 = smov 96
    %v182 = vld [vmem:[%s180] ss:$-56 sm:%s181]
    %vm183 = vcmask 1046533
    %v184 = vsel %vm183, %v182, %v179
    %s185 = scalar_lea.vmem %s0, 45
    %v186 = vld [vmem:[%s185] sm:$0x80]
    %vm187 = vcmask 1047559
    %v188 = vsel %vm187, %v186, %v184
    %189 = vrot.lane.b32.xlu0 %v188, 64
    %v190 = vpop.permute.xlu0 %189
    %vm191 = vcmask 654848
    %192 = vst.msk [vmem:[#allocation0] sm:$0x7] %vm191, %v190
    %s193 = scalar_lea.vmem [#allocation0], 5
    %194 = vst.msk [vmem:[%s193] sm:$0x38] %vm191, %v190
    %s195 = scalar_lea.vmem [#allocation0], 10
    %196 = vst.msk [vmem:[%s195] sm:$0xc0] %vm191, %v190
    %s197 = scalar_lea.vmem %s0, 84
    %s198 = smov 3
    %v199 = vld [vmem:[%s197] ss:$-56 sm:%s198]
    %s200 = scalar_lea.vmem %s0, 58
    %v201 = vld [vmem:[%s200] sm:$0x4]
    %vm202 = vcmask 1042434
    %v203 = vsel %vm202, %v201, %v199
    %s204 = scalar_lea.vmem %s0, 89
    %v205 = vld [vmem:[%s204] sm:$0x8]
    %vm206 = vcmask 1043459
    %v207 = vsel %vm206, %v205, %v203
    %208 = vrot.lane.b32.xlu0 %v207, 64
    %v209 = vpop.permute.xlu0 %208
    %vm210 = vcmask 654848
    %s211 = scalar_lea.vmem [#allocation0], 18
    %212 = vst.msk [vmem:[%s211] ss:$6 sm:$0x3] %vm210, %v209
    %s213 = scalar_lea.vmem [#allocation0], 23
    %214 = vst.msk [vmem:[%s213] sm:$0xc] %vm210, %v209
    %s215 = scalar_lea.vmem %s0, 3
    %v216 = vld [vmem:[%s215] sm:$0x1]
    %s217 = scalar_lea.vmem %s0, 34
    %v218 = vld [vmem:[%s217] sm:$0x2]
    %vm219 = vcmask 1041409
    %v220 = vsel %vm219, %v218, %v216
    %s221 = scalar_lea.vmem %s0, 179
    %s222 = smov 12
    %v223 = vld [vmem:[%s221] ss:$-56 sm:%s222]
    %vm224 = vcmask 1043458
    %v225 = vsel %vm224, %v223, %v220
    %s226 = scalar_lea.vmem %s0, 39
    %v227 = vld [vmem:[%s226] sm:$0x10]
    %vm228 = vcmask 1044484
    %v229 = vsel %vm228, %v227, %v225
    %s230 = scalar_lea.vmem %s0, 355
    %s231 = smov 96
    %v232 = vld [vmem:[%s230] ss:$-56 sm:%s231]
    %vm233 = vcmask 1046533
    %v234 = vsel %vm233, %v232, %v229
    %s235 = scalar_lea.vmem %s0, 44
    %v236 = vld [vmem:[%s235] sm:$0x80]
    %vm237 = vcmask 1047559
    %v238 = vsel %vm237, %v236, %v234
    %239 = vrot.lane.b32.xlu0 %v238, 48
    %v240 = vpop.permute.xlu0 %239
    %vm241 = vcmask 523648
    %242 = vst.msk [vmem:[#allocation0] sm:$0x7] %vm241, %v240
    %s243 = scalar_lea.vmem [#allocation0], 5
    %244 = vst.msk [vmem:[%s243] sm:$0x38] %vm241, %v240
    %s245 = scalar_lea.vmem [#allocation0], 10
    %246 = vst.msk [vmem:[%s245] sm:$0xc0] %vm241, %v240
    %s247 = scalar_lea.vmem %s0, 83
    %s248 = smov 3
    %v249 = vld [vmem:[%s247] ss:$-56 sm:%s248]
    %s250 = scalar_lea.vmem %s0, 57
    %v251 = vld [vmem:[%s250] sm:$0x4]
    %vm252 = vcmask 1042434
    %v253 = vsel %vm252, %v251, %v249
    %s254 = scalar_lea.vmem %s0, 88
    %v255 = vld [vmem:[%s254] sm:$0x8]
    %vm256 = vcmask 1043459
    %v257 = vsel %vm256, %v255, %v253
    %258 = vrot.lane.b32.xlu0 %v257, 48
    %v259 = vpop.permute.xlu0 %258
    %vm260 = vcmask 523648
    %s261 = scalar_lea.vmem [#allocation0], 18
    %262 = vst.msk [vmem:[%s261] ss:$6 sm:$0x3] %vm260, %v259
    %s263 = scalar_lea.vmem [#allocation0], 23
    %264 = vst.msk [vmem:[%s263] sm:$0xc] %vm260, %v259
    %s265 = scalar_lea.vmem %s0, 2
    %v266 = vld [vmem:[%s265] sm:$0x1]
    %s267 = scalar_lea.vmem %s0, 33
    %v268 = vld [vmem:[%s267] sm:$0x2]
    %vm269 = vcmask 1041409
    %v270 = vsel %vm269, %v268, %v266
    %s271 = scalar_lea.vmem %s0, 178
    %s272 = smov 12
    %v273 = vld [vmem:[%s271] ss:$-56 sm:%s272]
    %vm274 = vcmask 1043458
    %v275 = vsel %vm274, %v273, %v270
    %s276 = scalar_lea.vmem %s0, 38
    %v277 = vld [vmem:[%s276] sm:$0x10]
    %vm278 = vcmask 1044484
    %v279 = vsel %vm278, %v277, %v275
    %s280 = scalar_lea.vmem %s0, 354
    %s281 = smov 96
    %v282 = vld [vmem:[%s280] ss:$-56 sm:%s281]
    %vm283 = vcmask 1046533
    %v284 = vsel %vm283, %v282, %v279
    %s285 = scalar_lea.vmem %s0, 43
    %v286 = vld [vmem:[%s285] sm:$0x80]
    %vm287 = vcmask 1047559
    %v288 = vsel %vm287, %v286, %v284
    %289 = vrot.lane.b32.xlu0 %v288, 32
    %v290 = vpop.permute.xlu0 %289
    %vm291 = vcmask 392448
    %292 = vst.msk [vmem:[#allocation0] sm:$0x7] %vm291, %v290
    %s293 = scalar_lea.vmem [#allocation0], 5
    %294 = vst.msk [vmem:[%s293] sm:$0x38] %vm291, %v290
    %s295 = scalar_lea.vmem [#allocation0], 10
    %296 = vst.msk [vmem:[%s295] sm:$0xc0] %vm291, %v290
    %s297 = scalar_lea.vmem %s0, 82
    %s298 = smov 3
    %v299 = vld [vmem:[%s297] ss:$-56 sm:%s298]
    %s300 = scalar_lea.vmem %s0, 56
    %v301 = vld [vmem:[%s300] sm:$0x4]
    %vm302 = vcmask 1042434
    %v303 = vsel %vm302, %v301, %v299
    %s304 = scalar_lea.vmem %s0, 87
    %v305 = vld [vmem:[%s304] sm:$0x8]
    %vm306 = vcmask 1043459
    %v307 = vsel %vm306, %v305, %v303
    %308 = vrot.lane.b32.xlu0 %v307, 32
    %v309 = vpop.permute.xlu0 %308
    %vm310 = vcmask 392448
    %s311 = scalar_lea.vmem [#allocation0], 18
    %312 = vst.msk [vmem:[%s311] ss:$6 sm:$0x3] %vm310, %v309
    %s313 = scalar_lea.vmem [#allocation0], 23
    %314 = vst.msk [vmem:[%s313] sm:$0xc] %vm310, %v309
    %s315 = scalar_lea.vmem %s0, 1
    %v316 = vld [vmem:[%s315] sm:$0x1]
    %s317 = scalar_lea.vmem %s0, 32
    %v318 = vld [vmem:[%s317] sm:$0x2]
    %vm319 = vcmask 1041409
    %v320 = vsel %vm319, %v318, %v316
    %s321 = scalar_lea.vmem %s0, 177
    %s322 = smov 12
    %v323 = vld [vmem:[%s321] ss:$-56 sm:%s322]
    %vm324 = vcmask 1043458
    %v325 = vsel %vm324, %v323, %v320
    %s326 = scalar_lea.vmem %s0, 37
    %v327 = vld [vmem:[%s326] sm:$0x10]
    %vm328 = vcmask 1044484
    %v329 = vsel %vm328, %v327, %v325
    %s330 = scalar_lea.vmem %s0, 353
    %s331 = smov 96
    %v332 = vld [vmem:[%s330] ss:$-56 sm:%s331]
    %vm333 = vcmask 1046533
    %v334 = vsel %vm333, %v332, %v329
    %s335 = scalar_lea.vmem %s0, 42
    %v336 = vld [vmem:[%s335] sm:$0x80]
    %vm337 = vcmask 1047559
    %v338 = vsel %vm337, %v336, %v334
    %339 = vrot.lane.b32.xlu0 %v338, 16
    %v340 = vpop.permute.xlu0 %339
    %vm341 = vcmask 261248
    %342 = vst.msk [vmem:[#allocation0] sm:$0x7] %vm341, %v340
    %s343 = scalar_lea.vmem [#allocation0], 5
    %344 = vst.msk [vmem:[%s343] sm:$0x38] %vm341, %v340
    %s345 = scalar_lea.vmem [#allocation0], 10
    %346 = vst.msk [vmem:[%s345] sm:$0xc0] %vm341, %v340
    %s347 = scalar_lea.vmem %s0, 81
    %s348 = smov 3
    %v349 = vld [vmem:[%s347] ss:$-56 sm:%s348]
    %s350 = scalar_lea.vmem %s0, 55
    %v351 = vld [vmem:[%s350] sm:$0x4]
    %vm352 = vcmask 1042434
    %v353 = vsel %vm352, %v351, %v349
    %s354 = scalar_lea.vmem %s0, 86
    %v355 = vld [vmem:[%s354] sm:$0x8]
    %vm356 = vcmask 1043459
    %v357 = vsel %vm356, %v355, %v353
    %358 = vrot.lane.b32.xlu0 %v357, 16
    %v359 = vpop.permute.xlu0 %358
    %vm360 = vcmask 261248
    %s361 = scalar_lea.vmem [#allocation0], 18
    %362 = vst.msk [vmem:[%s361] ss:$6 sm:$0x3] %vm360, %v359
    %s363 = scalar_lea.vmem [#allocation0], 23
    %364 = vst.msk [vmem:[%s363] sm:$0xc] %vm360, %v359
    %s366 = sshllo.u32 0, 4
    %v368 = vld [vmem:[#allocation0] sm:%s366]
    %s369 = sshllo.u32 0, 4
    %370 = vst [vmem:[%s1] sm:%s369] %v368
    %s371 = scalar_lea.vmem [#allocation0], 8
    %v372 = vld [vmem:[%s371] sm:%s366]
    %s373 = sshllo.u32 0, 4
    %s374 = scalar_lea.vmem %s1, 4
    %375 = vst [vmem:[%s374] sm:%s373] %v372
    %s376 = scalar_lea.vmem [#allocation0], 16
    %v377 = vld [vmem:[%s376] sm:%s366]
    %s378 = sshllo.u32 0, 4
    %s379 = smul.addr 4, 2
    %s380 = scalar_lea.vmem %s1, %s379
    %381 = vst [vmem:[%s380] sm:%s378] %v377
    %s382 = scalar_lea.vmem [#allocation0], 24
    %v383 = vld [vmem:[%s382] sm:%s366]
    %s384 = sshllo.u32 0, 4
    %s385 = smul.addr 4, 3
    %s386 = scalar_lea.vmem %s1, %s385
    %387 = vst [vmem:[%s386] sm:%s384] %v383

// kernel: simple_shader.1
$region0: #{simple_shader.1}
  #allocation0 [shape = 'u32[]', space=smem, size = 0x4, offset = 0x4, fixed_abs, tag = 'smem constant byte address 0x4 - core index']
  #allocation1 [shape = 'u32[144,128]{1,0:T(1,128)}', space=vmem, size = 0x12000, scoped, tag = 'internal scratch']
  %s0 = inlined_call_operand.vmem [shape: f32[3], index: 0, kind: input, shape index: {}]
  %s1 = inlined_call_operand.vmem [shape: f32[72], index: 1, kind: input, shape index: {}]
  %s2 = inlined_call_operand.vmem [shape: f32[3,8,128], index: 2, kind: input, shape index: {}]
  %s3 = inlined_call_operand.vmem [shape: s32[8,128], index: 3, kind: input, shape index: {}]
  %s4 = inlined_call_operand.vmem [shape: f32[4,8,128], index: 4, kind: output, shape index: {}]
  %s5 = sld [smem:[#allocation0]]
  $region34: #{simple_shader.1} parent=0
    _
  %s7 = ssub.s32 1, %s5
  %s8 = scalar_select 0, %s7, %s5
  $region1: #{simple_shader.1} parent=0
    #allocation2 [shape = 'u8[512]{0}', space=smem, size = 0x200, scoped, tag = 'input window, operand 0, single buffered']
    #allocation3 [shape = 's32[1]{0}', space=sflag, size = 0x4, scoped, tag = 'scoped memory for simple_shader.1']
    #allocation4 [shape = 'u8[512]{0}', space=smem, size = 0x200, scoped, tag = 'input window, operand 1, single buffered']
    #allocation5 [shape = 's32[1]{0}', space=sflag, size = 0x4, scoped, tag = 'scoped memory for simple_shader.1']
    %9 = vsyncpa [#allocation3], 0
    %10 = vsyncpa [#allocation5], 0
    // Predicated region
    $region2: #{simple_shader.1} parent=1 // pred_check
      _
    $region3: #{simple_shader.1} parent=1 // pred_check_branch
      %12 = sbr.rel (0) target = $region5
    $region4: #{simple_shader.1} parent=1 // pred_region
      %s14 = ssub.s32 16, 16
      %15 = vsyncadd [#allocation3], %s14
      %s17 = sshll.u32 %s0, 4
      %s18 = int_to_ptr.vmem [resolvable:$true] %s17
      %20 = dma.vmem_to_smem %s18, 16, [#allocation2], [#allocation3]
    $region5: #{simple_shader.1} parent=1 // pred_fallthru
      _
    // Predicated region
    $region6: #{simple_shader.1} parent=1 // pred_check
      _
    $region7: #{simple_shader.1} parent=1 // pred_check_branch
      %22 = sbr.rel (0) target = $region9
    $region8: #{simple_shader.1} parent=1 // pred_region
      %s24 = ssub.s32 16, 16
      %25 = vsyncadd [#allocation5], %s24
      %s27 = sshll.u32 %s1, 4
      %s28 = int_to_ptr.vmem [resolvable:$true] %s27
      %30 = dma.vmem_to_smem %s28, 16, [#allocation4], [#allocation5]
    $region9: #{simple_shader.1} parent=1 // pred_fallthru
      _
    // Predicated region
    $region10: #{simple_shader.1} parent=1 // pred_check
      _
    $region11: #{simple_shader.1} parent=1 // pred_check_branch
      %32 = sbr.rel (0) target = $region13
    $region12: #{simple_shader.1} parent=1 // pred_region
      _
    $region13: #{simple_shader.1} parent=1 // pred_fallthru
      _
    // Predicated region
    $region14: #{simple_shader.1} parent=1 // pred_check
      _
    $region15: #{simple_shader.1} parent=1 // pred_check_branch
      %34 = sbr.rel (0) target = $region17
    $region16: #{simple_shader.1} parent=1 // pred_region
      _
    $region17: #{simple_shader.1} parent=1 // pred_fallthru
      _
    // Predicated region
    $region18: #{simple_shader.1} parent=1 // pred_check
      _
    $region19: #{simple_shader.1} parent=1 // pred_check_branch
      %36 = sbr.rel (0) target = $region21
    $region20: #{simple_shader.1} parent=1 // pred_region
      %37 = dma.done [#allocation3], 16
    $region21: #{simple_shader.1} parent=1 // pred_fallthru
      _
    // Predicated region
    $region22: #{simple_shader.1} parent=1 // pred_check
      _
    $region23: #{simple_shader.1} parent=1 // pred_check_branch
      %39 = sbr.rel (0) target = $region25
    $region24: #{simple_shader.1} parent=1 // pred_region
      %40 = dma.done [#allocation5], 16
    $region25: #{simple_shader.1} parent=1 // pred_fallthru
      _
    %41 = sfence
    %v42 = vld [vmem:[%s3] sm:$0xff]
    %vm43 = vcmp.lt.s32.totalorder %v42, 0
    %v44 = vld [vmem:[%s2] sm:$0xff]
    %s45 = scalar_lea.vmem %s2, 8
    %v46 = vld [vmem:[%s45] sm:$0xff]
    %s47 = scalar_lea.vmem %s2, 16
    %v48 = vld [vmem:[%s47] sm:$0xff]
    %vm49 = vcmp.eq.s32.totalorder %v42, 0
    %s50 = sld [smem:[#allocation4]]
    %v51 = vstv %s50
    %v52 = vsel %vm49, %v51, 0.0
    %s53 = sld [smem:[#allocation4 + $0x1]]
    %v54 = vstv %s53
    %v55 = vsel %vm49, %v54, 0.0
    %s56 = sld [smem:[#allocation4 + $0x2]]
    %v57 = vstv %s56
    %v58 = vsel %vm49, %v57, 0.0
    %s59 = sld [smem:[#allocation4 + $0x3]]
    %v60 = vstv %s59
    %v61 = vsel %vm49, %v60, 0.0
    %s62 = sld [smem:[#allocation4 + $0x4]]
    %v63 = vstv %s62
    %v64 = vsel %vm49, %v63, 0.0
    %s65 = sld [smem:[#allocation4 + $0x5]]
    %v66 = vstv %s65
    %v67 = vsel %vm49, %v66, 0.0
    %s68 = sld [smem:[#allocation4 + $0x6]]
    %v69 = vstv %s68
    %v70 = vsel %vm49, %v69, 0.0
    %s71 = sld [smem:[#allocation4 + $0x7]]
    %v72 = vstv %s71
    %v73 = vsel %vm49, %v72, 0.0
    %s74 = sld [smem:[#allocation4 + $0x8]]
    %v75 = vstv %s74
    %v76 = vsel %vm49, %v75, 0.0
    %vm77 = vcmp.eq.s32.totalorder %v42, 1
    %s78 = sld [smem:[#allocation4 + $0x9]]
    %v79 = vstv %s78
    %v80 = vsel %vm77, %v79, %v52
    %s81 = sld [smem:[#allocation4 + $0xa]]
    %v82 = vstv %s81
    %v83 = vsel %vm77, %v82, %v55
    %s84 = sld [smem:[#allocation4 + $0xb]]
    %v85 = vstv %s84
    %v86 = vsel %vm77, %v85, %v58
    %s87 = sld [smem:[#allocation4 + $0xc]]
    %v88 = vstv %s87
    %v89 = vsel %vm77, %v88, %v61
    %s90 = sld [smem:[#allocation4 + $0xd]]
    %v91 = vstv %s90
    %v92 = vsel %vm77, %v91, %v64
    %s93 = sld [smem:[#allocation4 + $0xe]]
    %v94 = vstv %s93
    %v95 = vsel %vm77, %v94, %v67
    %s96 = sld [smem:[#allocation4 + $0xf]]
    %v97 = vstv %s96
    %v98 = vsel %vm77, %v97, %v70
    %s99 = sld [smem:[#allocation4 + $0x10]]
    %v100 = vstv %s99
    %v101 = vsel %vm77, %v100, %v73
    %s102 = sld [smem:[#allocation4 + $0x11]]
    %v103 = vstv %s102
    %v104 = vsel %vm77, %v103, %v76
    %vm105 = vcmp.eq.s32.totalorder %v42, 2
    %s106 = sld [smem:[#allocation4 + $0x12]]
    %v107 = vstv %s106
    %v108 = vsel %vm105, %v107, %v80
    %s109 = sld [smem:[#allocation4 + $0x13]]
    %v110 = vstv %s109
    %v111 = vsel %vm105, %v110, %v83
    %s112 = sld [smem:[#allocation4 + $0x14]]
    %v113 = vstv %s112
    %v114 = vsel %vm105, %v113, %v86
    %s115 = sld [smem:[#allocation4 + $0x15]]
    %v116 = vstv %s115
    %v117 = vsel %vm105, %v116, %v89
    %s118 = sld [smem:[#allocation4 + $0x16]]
    %v119 = vstv %s118
    %v120 = vsel %vm105, %v119, %v92
    %s121 = sld [smem:[#allocation4 + $0x17]]
    %v122 = vstv %s121
    %v123 = vsel %vm105, %v122, %v95
    %s124 = sld [smem:[#allocation4 + $0x18]]
    %v125 = vstv %s124
    %v126 = vsel %vm105, %v125, %v98
    %s127 = sld [smem:[#allocation4 + $0x19]]
    %v128 = vstv %s127
    %v129 = vsel %vm105, %v128, %v101
    %s130 = sld [smem:[#allocation4 + $0x1a]]
    %v131 = vstv %s130
    %v132 = vsel %vm105, %v131, %v104
    %vm133 = vcmp.eq.s32.totalorder %v42, 3
    %s134 = sld [smem:[#allocation4 + $0x1b]]
    %v135 = vstv %s134
    %v136 = vsel %vm133, %v135, %v108
    %s137 = sld [smem:[#allocation4 + $0x1c]]
    %v138 = vstv %s137
    %v139 = vsel %vm133, %v138, %v111
    %s140 = sld [smem:[#allocation4 + $0x1d]]
    %v141 = vstv %s140
    %v142 = vsel %vm133, %v141, %v114
    %s143 = sld [smem:[#allocation4 + $0x1e]]
    %v144 = vstv %s143
    %v145 = vsel %vm133, %v144, %v117
    %s146 = sld [smem:[#allocation4 + $0x1f]]
    %v147 = vstv %s146
    %v148 = vsel %vm133, %v147, %v120
    %s149 = sld [smem:[#allocation4 + $0x20]]
    %v150 = vstv %s149
    %v151 = vsel %vm133, %v150, %v123
    %s152 = sld [smem:[#allocation4 + $0x21]]
    %v153 = vstv %s152
    %v154 = vsel %vm133, %v153, %v126
    %s155 = sld [smem:[#allocation4 + $0x22]]
    %v156 = vstv %s155
    %v157 = vsel %vm133, %v156, %v129
    %s158 = sld [smem:[#allocation4 + $0x23]]
    %v159 = vstv %s158
    %v160 = vsel %vm133, %v159, %v132
    %vm161 = vcmp.eq.s32.totalorder %v42, 4
    %s162 = sld [smem:[#allocation4 + $0x24]]
    %v163 = vstv %s162
    %v164 = vsel %vm161, %v163, %v136
    %s165 = sld [smem:[#allocation4 + $0x25]]
    %v166 = vstv %s165
    %v167 = vsel %vm161, %v166, %v139
    %s168 = sld [smem:[#allocation4 + $0x26]]
    %v169 = vstv %s168
    %v170 = vsel %vm161, %v169, %v142
    %s171 = sld [smem:[#allocation4 + $0x27]]
    %v172 = vstv %s171
    %v173 = vsel %vm161, %v172, %v145
    %s174 = sld [smem:[#allocation4 + $0x28]]
    %v175 = vstv %s174
    %v176 = vsel %vm161, %v175, %v148
    %s177 = sld [smem:[#allocation4 + $0x29]]
    %v178 = vstv %s177
    %v179 = vsel %vm161, %v178, %v151
    %s180 = sld [smem:[#allocation4 + $0x2a]]
    %v181 = vstv %s180
    %v182 = vsel %vm161, %v181, %v154
    %s183 = sld [smem:[#allocation4 + $0x2b]]
    %v184 = vstv %s183
    %v185 = vsel %vm161, %v184, %v157
    %s186 = sld [smem:[#allocation4 + $0x2c]]
    %v187 = vstv %s186
    %v188 = vsel %vm161, %v187, %v160
    %vm189 = vcmp.eq.s32.totalorder %v42, 5
    %s190 = sld [smem:[#allocation4 + $0x2d]]
    %v191 = vstv %s190
    %v192 = vsel %vm189, %v191, %v164
    %s193 = sld [smem:[#allocation4 + $0x2e]]
    %v194 = vstv %s193
    %v195 = vsel %vm189, %v194, %v167
    %s196 = sld [smem:[#allocation4 + $0x2f]]
    %v197 = vstv %s196
    %v198 = vsel %vm189, %v197, %v170
    %s199 = sld [smem:[#allocation4 + $0x30]]
    %v200 = vstv %s199
    %v201 = vsel %vm189, %v200, %v173
    %s202 = sld [smem:[#allocation4 + $0x31]]
    %v203 = vstv %s202
    %v204 = vsel %vm189, %v203, %v176
    %s205 = sld [smem:[#allocation4 + $0x32]]
    %v206 = vstv %s205
    %v207 = vsel %vm189, %v206, %v179
    %s208 = sld [smem:[#allocation4 + $0x33]]
    %v209 = vstv %s208
    %v210 = vsel %vm189, %v209, %v182
    %s211 = sld [smem:[#allocation4 + $0x34]]
    %v212 = vstv %s211
    %v213 = vsel %vm189, %v212, %v185
    %s214 = sld [smem:[#allocation4 + $0x35]]
    %v215 = vstv %s214
    %v216 = vsel %vm189, %v215, %v188
    %vm217 = vcmp.eq.s32.totalorder %v42, 6
    %s218 = sld [smem:[#allocation4 + $0x36]]
    %v219 = vstv %s218
    %v220 = vsel %vm217, %v219, %v192
    %s221 = sld [smem:[#allocation4 + $0x37]]
    %v222 = vstv %s221
    %v223 = vsel %vm217, %v222, %v195
    %s224 = sld [smem:[#allocation4 + $0x38]]
    %v225 = vstv %s224
    %v226 = vsel %vm217, %v225, %v198
    %s227 = sld [smem:[#allocation4 + $0x39]]
    %v228 = vstv %s227
    %v229 = vsel %vm217, %v228, %v201
    %s230 = sld [smem:[#allocation4 + $0x3a]]
    %v231 = vstv %s230
    %v232 = vsel %vm217, %v231, %v204
    %s233 = sld [smem:[#allocation4 + $0x3b]]
    %v234 = vstv %s233
    %v235 = vsel %vm217, %v234, %v207
    %s236 = sld [smem:[#allocation4 + $0x3c]]
    %v237 = vstv %s236
    %v238 = vsel %vm217, %v237, %v210
    %s239 = sld [smem:[#allocation4 + $0x3d]]
    %v240 = vstv %s239
    %v241 = vsel %vm217, %v240, %v213
    %s242 = sld [smem:[#allocation4 + $0x3e]]
    %v243 = vstv %s242
    %v244 = vsel %vm217, %v243, %v216
    %vm245 = vcmp.eq.s32.totalorder %v42, 7
    %s246 = sld [smem:[#allocation4 + $0x3f]]
    %v247 = vstv %s246
    %v248 = vsel %vm245, %v247, %v220
    %s249 = sld [smem:[#allocation4 + $0x40]]
    %v250 = vstv %s249
    %v251 = vsel %vm245, %v250, %v223
    %s252 = sld [smem:[#allocation4 + $0x41]]
    %v253 = vstv %s252
    %v254 = vsel %vm245, %v253, %v226
    %s255 = sld [smem:[#allocation4 + $0x42]]
    %v256 = vstv %s255
    %v257 = vsel %vm245, %v256, %v229
    %s258 = sld [smem:[#allocation4 + $0x43]]
    %v259 = vstv %s258
    %v260 = vsel %vm245, %v259, %v232
    %s261 = sld [smem:[#allocation4 + $0x44]]
    %v262 = vstv %s261
    %v263 = vsel %vm245, %v262, %v235
    %s264 = sld [smem:[#allocation4 + $0x45]]
    %v265 = vstv %s264
    %v266 = vsel %vm245, %v265, %v238
    %s267 = sld [smem:[#allocation4 + $0x46]]
    %v268 = vstv %s267
    %v269 = vsel %vm245, %v268, %v241
    %s270 = sld [smem:[#allocation4 + $0x47]]
    %v271 = vstv %s270
    %v272 = vsel %vm245, %v271, %v244
    %v273 = vmul.f32 %v248, %v44
    %v274 = vmul.f32 %v257, %v46
    %v275 = vadd.f32 %v273, %v274
    %v276 = vmul.f32 %v266, %v48
    %v277 = vadd.f32 %v275, %v276
    %s278 = sld [smem:[#allocation2]]
    %v279 = vstv %s278
    %v280 = vsel %vm43, %v279, %v277
    %281 = vst [vmem:[%s4] sm:$0xff] %v280
    %v282 = vmul.f32 %v251, %v44
    %v283 = vmul.f32 %v260, %v46
    %v284 = vadd.f32 %v282, %v283
    %v285 = vmul.f32 %v269, %v48
    %v286 = vadd.f32 %v284, %v285
    %s287 = sld [smem:[#allocation2 + $0x1]]
    %v288 = vstv %s287
    %v289 = vsel %vm43, %v288, %v286
    %s290 = scalar_lea.vmem %s4, 8
    %291 = vst [vmem:[%s290] sm:$0xff] %v289
    %v292 = vmul.f32 %v254, %v44
    %v293 = vmul.f32 %v263, %v46
    %v294 = vadd.f32 %v292, %v293
    %v295 = vmul.f32 %v272, %v48
    %v296 = vadd.f32 %v294, %v295
    %s297 = sld [smem:[#allocation2 + $0x2]]
    %v298 = vstv %s297
    %v299 = vsel %vm43, %v298, %v296
    %s300 = scalar_lea.vmem %s4, 16
    %301 = vst [vmem:[%s300] sm:$0xff] %v299
    %v302 = vsel %vm43, 0.0, 1.0
    %s303 = scalar_lea.vmem %s4, 24
    %304 = vst [vmem:[%s303] sm:$0xff] %v302
    // Predicated region
    $region26: #{simple_shader.1} parent=1 // pred_check
      _
    $region27: #{simple_shader.1} parent=1 // pred_check_branch
      %306 = sbr.rel (0) target = $region29
    $region28: #{simple_shader.1} parent=1 // pred_region
      _
    $region29: #{simple_shader.1} parent=1 // pred_fallthru
      _
    // Predicated region
    $region30: #{simple_shader.1} parent=1 // pred_check
      _
    $region31: #{simple_shader.1} parent=1 // pred_check_branch
      %308 = sbr.rel (0) target = $region33
    $region32: #{simple_shader.1} parent=1 // pred_region
      _
    $region33: #{simple_shader.1} parent=1 // pred_fallthru
      _
    %309 = vsyncpa [#allocation3], 1
    %310 = vsyncpa [#allocation5], 1

</llo_original>
